<compile_context>
chip_gen: v7x
topology: tpu7x:2x2x1
jax: 0.10.0
libtpu: 0.0.40
codegen_flags: <defaults>
</compile_context>

<pallas_src>
import numpy as np
import jax
import jax.numpy as jnp
from jax.experimental import pallas as pl
from jax.experimental.pallas import tpu as pltpu


# ----------------------------------------------------------------------------
# Fast identity paths.
# ----------------------------------------------------------------------------
def _hbm_copy_kernel(x_hbm_ref, o_hbm_ref, sem):
    # Single whole-array HBM->HBM DMA: zero VMEM staging, zero VLIW vector
    # slots, no per-block grid steps.
    cp = pltpu.make_async_copy(x_hbm_ref, o_hbm_ref, sem)
    cp.start()
    cp.wait()


def _hbm_copy(x):
    """Identity copy as one HBM->HBM DMA (both refs stay in pl.ANY/HBM)."""
    return pl.pallas_call(
        _hbm_copy_kernel,
        out_shape=jax.ShapeDtypeStruct(x.shape, x.dtype),
        in_specs=[pl.BlockSpec(memory_space=pl.ANY)],
        out_specs=pl.BlockSpec(memory_space=pl.ANY),
        scratch_shapes=[pltpu.SemaphoreType.DMA],
    )(x)


def passthrough(x, *, donate=False):
    """Identity over a (B, D) (or flattenable) array.

    donate=True  : return the input as-is (free — no kernel, no HBM traffic).
    donate=False : materialize a fresh buffer with a single HBM->HBM DMA.
    """
    if x.ndim != 2:
        # Base class speaks of "flattened inputs of dimension in_dim".
        x = x.reshape(x.shape[0], -1)
    if donate:
        return x
    return _hbm_copy(x)


# ----------------------------------------------------------------------------
# Staged VMEM template (skeleton for real subclass compute).
# ----------------------------------------------------------------------------
_TARGET_TILE_BYTES = 8 * 1024 * 1024     # ~8 MiB per block
_VMEM_LIMIT_BYTES = 48 * 1024 * 1024     # 2 arrays x 2 buffers x 8 MiB + slack
_MIN_GRID_STEPS = 4                      # >= 2 blocks per TensorCore on v7x
_SMALL_ARRAY_BYTES = 2 * 1024 * 1024     # don't bother splitting tiny arrays


def _copy_block_kernel(x_ref, o_ref):
    # Subclasses replace this body with real work (matmul, norm, etc.).
    o_ref[...] = x_ref[...]


def _sublane_multiple(itemsize):
    # Rows packed per vreg: f32 -> 8, bf16/f16 -> 16, int8/fp8 -> 32.
    if itemsize >= 4:
        return 8
    if itemsize == 2:
        return 16
    return 32


def _choose_blocks(B, D, itemsize):
    """Pick a lane-dense block of ~_TARGET_TILE_BYTES.

    Prefers the full D extent in the last dim (unmasked vst), rounds rows to a
    dtype-aware sublane multiple, and caps rows so non-tiny arrays yield at
    least _MIN_GRID_STEPS row-blocks (pipeline overlap + both v7x cores busy).
    """
    sub = _sublane_multiple(itemsize)
    row_bytes = max(D * itemsize, 1)
    total_bytes = B * row_bytes

    if sub * row_bytes <= _TARGET_TILE_BYTES:
        # Full last dim fits in the budget: tile only along rows.
        block_cols = D                                   # full array dim -> legal
        rows_budget = max(sub, (_TARGET_TILE_BYTES // row_bytes // sub) * sub)
        if total_bytes >= _SMALL_ARRAY_BYTES and B >= _MIN_GRID_STEPS * sub:
            # Guarantee >= _MIN_GRID_STEPS row-blocks.
            rows_cap = max(sub, (pl.cdiv(B, _MIN_GRID_STEPS) // sub) * sub)
            rows_budget = min(rows_budget, rows_cap)
        block_rows = B if rows_budget >= B else rows_budget
    else:
        # Even `sub` rows of the full D blow the budget: split the lane axis
        # too.  Tall blocks amortize per-step overhead; keep columns a
        # multiple of 128 and reasonably wide (>= 512 lanes) for dense DMAs.
        block_rows = min(B, max(sub, (256 // sub) * sub))
        cols = _TARGET_TILE_BYTES // max(block_rows * itemsize, 1)
        block_cols = max(512, (cols // 128) * 128)
        if block_cols > D:
            block_cols = D
    return block_rows, block_cols


def staged_passthrough(x):
    """Stream a (B, D) array block-by-block through VMEM and return it
    unchanged.  This is the pipelined template subclasses adapt for real
    compute; for pure identity use `passthrough` instead (it is ~2x cheaper).
    HBM traffic here is 2 * B * D * itemsize (read + write-back)."""
    if x.ndim != 2:
        x = x.reshape(x.shape[0], -1)
    B, D = x.shape
    block_rows, block_cols = _choose_blocks(B, D, x.dtype.itemsize)
    grid = (pl.cdiv(B, block_rows), pl.cdiv(D, block_cols))

    return pl.pallas_call(
        _copy_block_kernel,
        out_shape=jax.ShapeDtypeStruct((B, D), x.dtype),
        grid=grid,
        in_specs=[pl.BlockSpec((block_rows, block_cols), lambda i, j: (i, j))],
        out_specs=pl.BlockSpec((block_rows, block_cols), lambda i, j: (i, j)),
        compiler_params=pltpu.CompilerParams(
            dimension_semantics=("parallel", "parallel"),
            vmem_limit_bytes=_VMEM_LIMIT_BYTES,
        ),
    )(x)


# ----------------------------------------------------------------------------
# Coder: faithful port of the PyTorch base class.
# ----------------------------------------------------------------------------
class Coder:
    """
    Base class for implementing encoders and decoders (JAX/Pallas port).

    The reference PyTorch forward() is a no-op (`pass`), i.e. it returns None.
    We preserve that exactly.  No parameters are registered in __init__.
    """

    def __init__(self, num_in, num_out, in_dim):
        self.num_in = num_in
        self.num_out = num_out
        # `in_dim` is accepted but (like the reference) not stored/used.

    def forward(self, in_data):
        # TODO(synk): base-class forward is `pass` in PyTorch — no compute to
        # translate; subclasses should call the Pallas hot paths above
        # (`passthrough` / `staged_passthrough` with a real kernel body).
        return None

    def __call__(self, in_data):
        return self.forward(in_data)


if __name__ == "__main__":
    # Small, deterministic example consistent with the module's signature:
    # num_in=4 input units, each of flattened dimension in_dim=32,
    # batched over batch=2  ->  in_data shape (2, 4 * 32) = (2, 128).
    batch, num_in, num_out, in_dim = 2, 4, 2, 32
    key = jax.random.PRNGKey(0)
    in_data = jax.random.normal(key, (batch, num_in * in_dim), dtype=jnp.float32)
    expected = np.asarray(jax.device_get(in_data))

    coder = Coder(num_in=num_in, num_out=num_out, in_dim=in_dim)

    # Exact base-class semantics: forward returns None.
    assert coder(in_data) is None

    # 1) donate=True: true identity, no kernel, zero HBM traffic.
    out_id = passthrough(in_data, donate=True)
    assert out_id.shape == expected.shape
    assert np.allclose(np.asarray(jax.device_get(out_id)), expected)

    # 2) donate=False (default): single HBM->HBM DMA copy kernel.
    out_dma = jax.block_until_ready(passthrough(in_data))
    assert out_dma.shape == expected.shape
    assert np.allclose(np.asarray(jax.device_get(out_dma)), expected)

    # 3) Staged VMEM template (subclass skeleton), including a ragged
    #    (non-128-multiple) width: block dims fall back to full array extents,
    #    so no host-side pad/slice is ever needed.
    out_staged = jax.block_until_ready(staged_passthrough(in_data))
    assert np.allclose(np.asarray(jax.device_get(out_staged)), expected)

    x2 = jnp.arange(2 * 200, dtype=jnp.float32).reshape(2, 200)
    out2 = jax.block_until_ready(staged_passthrough(x2))
    assert np.allclose(np.asarray(jax.device_get(out2)),
                       np.arange(2 * 200, dtype=np.float32).reshape(2, 200))

    print("KERNEL_OK")
</pallas_src>

<mosaic_0001>
module attributes {stable_mosaic.version = 11 : i64} {
  func.func @_hbm_copy_kernel(%arg0: memref<2x128xf32, #tpu.memory_space<any>>, %arg1: memref<2x128xf32, #tpu.memory_space<any>>, %arg2: memref<!tpu.dma_semaphore, #tpu.memory_space<semaphore_mem>>) attributes {dimension_semantics = [], scalar_prefetch = 0 : i64, scratch_operands = 1 : i64, tpu.core_type = #tpu.core_type<tc>} {
    tpu.enqueue_dma source(%arg0 : memref<2x128xf32, #tpu.memory_space<any>>) target(%arg1 : memref<2x128xf32, #tpu.memory_space<any>>) target_semaphore(%arg2 : memref<!tpu.dma_semaphore, #tpu.memory_space<semaphore_mem>>)
    tpu.wait_dma2 semaphore(%arg2 : memref<!tpu.dma_semaphore, #tpu.memory_space<semaphore_mem>>) src(%arg0 : memref<2x128xf32, #tpu.memory_space<any>>) dst(%arg1 : memref<2x128xf32, #tpu.memory_space<any>>)
    return
  }
}

</mosaic_0001>

<llo_original>
// kernel: tpu_custom_call.1
$region0: #{tpu_custom_call.1}
  #allocation0 [shape = 'u32[]', space=smem, size = 0x4, offset = 0x4, fixed_abs, tag = 'smem constant byte address 0x4 - core index']
  #allocation1 [shape = 'u32[144,128]{1,0:T(1,128)}', space=vmem, size = 0x12000, scoped, tag = 'internal scratch']
  #allocation2 [shape = 's32[1]{0}', space=sflag, size = 0x4, scoped, tag = 'scratch operand']
  #allocation3 [shape = 's32[]', space=sflag, size = 0x4, offset = 0, fixed_abs, tag = 'sflag constant byte address 0x0 - dummy sync flag']
  #allocation4 [shape = 'u32[0]{0}', space=smem, size = 0, offset = 0, fixed_abs, tag = 'smem constant byte address 0x0 - null']
  %s0 = inlined_call_operand.hbm [shape: f32[2,128], index: 0, kind: input, shape index: {}]
  %s1 = inlined_call_operand.hbm [shape: f32[2,128], index: 1, kind: output, shape index: {}]
  %s2 = sld [smem:[#allocation0]]
  $region2: #{tpu_custom_call.1} parent=0
    _
  %s4 = ssub.s32 1, %s2
  %s5 = scalar_select 0, %s4, %s2
  %s7 = sshll.u32 1, 14
  %s8 = sxor.u32 4294967295, %s7
  %s11 = sshll.u32 3, 24
  %s12 = sxor.u32 4294967295, %s11
  %s13 = sand.u32 0, %s12
  %s15 = sor.u32 %s13, 0
  %18 = dma.general %s0, 32, %s1, [#allocation2], [#allocation3], [#allocation4], %s15, 0
  %s19 = smul.u32 2, 1
  %s20 = sshll.u32 %s19, 4
  %21 = dma.done [#allocation2], %s20
  %22 = vsyncmov [#allocation2]
  %s23 = vpop.sfrf %22
  %p24 = scmp.eq.s32.totalorder %s23, 0
  %p25 = pneg %p24
  %27 = shalt.err (%p25)

</llo_original>
